<compile_context>
chip_gen: v5e
topology: v5e:2x2
jax: 0.10.0
libtpu: 0.0.40
codegen_flags: <defaults>
</compile_context>

<pallas_src>
import functools

import jax
import jax.numpy as jnp
from jax.experimental import pallas as pl
from jax.experimental.pallas import tpu as pltpu


def _round_up(x, m):
    return (x + m - 1) // m * m


# ----------------------------------------------------------------------------- kernels
def _focal_terms(x, t, *, alpha, gamma):
    """Elementwise sigmoid focal loss and sigmoid(x), derived from a single exp().

    e = exp(-|x|) feeds both the stable BCE-with-logits log term and the sigmoid
    (via an approx EUP reciprocal): ~1 exp + 1 log (+ cheap vrcp) per element.
    """
    e = jnp.exp(-jnp.abs(x))
    inv = pl.reciprocal(1.0 + e, approx=True)
    p = jnp.where(x >= 0.0, inv, e * inv)                   # sigmoid(x)
    ce = jnp.maximum(x, 0.0) - x * t + jnp.log(1.0 + e)     # BCE-with-logits (stable)
    p_t = p * t + (1.0 - p) * (1.0 - t)
    base = 1.0 - p_t
    focal_w = base * base if float(gamma) == 2.0 else base ** gamma
    loss = ce * focal_w
    if alpha >= 0:
        loss = (alpha * t + (1.0 - alpha) * (1.0 - t)) * loss
    return loss, p


def _class_focal_card_kernel(x_ref, cls_ref, foc_ref, card_ref, *,
                             alpha, gamma, n_valid_rows):
    """Fused classification sigmoid-focal loss + cardinality flags (one logits pass).

    One-hot targets are built in-kernel from int32 class ids; padded rows masked.
    """
    i = pl.program_id(0)
    tr, c = x_ref.shape
    x = x_ref[...].astype(jnp.float32)
    cls = cls_ref[...]                                           # (tr, 1) int32
    col = jax.lax.broadcasted_iota(jnp.int32, (tr, c), 1)
    row = i * tr + jax.lax.broadcasted_iota(jnp.int32, (tr, 1), 0)
    valid = (row < n_valid_rows).astype(jnp.float32)             # (tr, 1)

    t = (col == cls).astype(jnp.float32)                         # "no-object" id -> all-zero row
    loss, _ = _focal_terms(x, t, alpha=alpha, gamma=gamma)
    foc_ref[...] = jnp.sum(loss, axis=1, keepdims=True) * valid  # per-row focal sum

    # cardinality: argmax over classes != C-1  <=>  max(first C-1 cols) >= last col
    neg = jnp.float32(-1e30)
    head_max = jnp.max(jnp.where(col < c - 1, x, neg), axis=1, keepdims=True)
    last = jnp.max(jnp.where(col == c - 1, x, neg), axis=1, keepdims=True)
    card_ref[...] = (head_max >= last).astype(jnp.float32) * valid


def _mask_focal_dice_kernel(x_ref, t_ref, foc_ref, dice_ref,
                            foc_acc, num_acc, den_acc, *,
                            alpha, gamma, n_rows, n_cols):
    """Fused mask focal + dice: reads smask/tmask once per tile.

    Grid = (row_tiles [parallel], col_tiles [arbitrary; reduction axis last]).
    Per-row partial sums live in VMEM scratch; outputs written on the last column
    step; padded rows/cols masked via iota comparisons (f32 accumulation).
    """
    i = pl.program_id(0)
    k = pl.program_id(1)
    tr, tc = x_ref.shape

    @pl.when(k == 0)
    def _():
        foc_acc[...] = jnp.zeros_like(foc_acc)
        num_acc[...] = jnp.zeros_like(num_acc)
        den_acc[...] = jnp.zeros_like(den_acc)

    x = x_ref[...].astype(jnp.float32)
    t = t_ref[...].astype(jnp.float32)
    row = i * tr + jax.lax.broadcasted_iota(jnp.int32, (tr, tc), 0)
    colg = k * tc + jax.lax.broadcasted_iota(jnp.int32, (tr, tc), 1)
    validf = jnp.logical_and(row < n_rows, colg < n_cols).astype(jnp.float32)

    loss, p = _focal_terms(x, t, alpha=alpha, gamma=gamma)
    loss = loss * validf
    p = p * validf
    t = t * validf

    foc_acc[...] += jnp.sum(loss, axis=1, keepdims=True)
    num_acc[...] += jnp.sum(p * t, axis=1, keepdims=True)
    den_acc[...] += jnp.sum(p + t, axis=1, keepdims=True)

    @pl.when(k == pl.num_programs(1) - 1)
    def _():
        foc_ref[...] = foc_acc[...]
        # padded rows: num=den=0 -> dice = 1 - 1/1 = 0 (no bias in the final sum)
        dice_ref[...] = 1.0 - (2.0 * num_acc[...] + 1.0) / (den_acc[...] + 1.0)


# ----------------------------------------------------------------------------- wrappers
def class_focal_and_cardinality(logits, target_classes, *, alpha, gamma=2.0):
    """Returns (total focal-loss sum over all [B,Q,C] elements, card_pred[B])."""
    B, Q, C = logits.shape
    R = B * Q
    x = logits.reshape(R, C)
    cls = target_classes.reshape(R, 1).astype(jnp.int32)
    tr = min(256, _round_up(R, 8))
    rpad = _round_up(R, tr)                       # bucketed padding -> fewer recompiles
    if rpad != R:
        x = jnp.pad(x, ((0, rpad - R), (0, 0)))
        cls = jnp.pad(cls, ((0, rpad - R), (0, 0)), constant_values=C)
    kern = functools.partial(_class_focal_card_kernel, alpha=alpha, gamma=gamma,
                             n_valid_rows=R)
    foc_rows, card_rows = pl.pallas_call(
        kern,
        grid=(rpad // tr,),
        out_shape=(jax.ShapeDtypeStruct((rpad, 1), jnp.float32),
                   jax.ShapeDtypeStruct((rpad, 1), jnp.float32)),
        in_specs=[pl.BlockSpec((tr, C), lambda i: (i, 0)),
                  pl.BlockSpec((tr, 1), lambda i: (i, 0))],
        out_specs=(pl.BlockSpec((tr, 1), lambda i: (i, 0)),
                   pl.BlockSpec((tr, 1), lambda i: (i, 0))),
        compiler_params=pltpu.CompilerParams(dimension_semantics=("parallel",)),
    )(x, cls)
    focal_total = jnp.sum(foc_rows)
    card_pred = jnp.sum(card_rows[:R, 0].reshape(B, Q), axis=1)
    return focal_total, card_pred


def mask_focal_dice_sums(smask, tmask, *, alpha=0.25, gamma=2.0):
    """Fused focal + dice sums over matched instance masks ([N, M] logits vs targets)."""
    N, M = smask.shape
    tr = min(64, _round_up(N, 16))                # multiple of 16: bf16 targets pack (16,128)
    tc = min(1024, _round_up(M, 128))             # 128..1024 lanes, VMEM-safe on v5e/v6e/v7x
    npad = _round_up(N, tr)
    mpad = _round_up(M, tc)
    if (npad, mpad) != (N, M):
        smask = jnp.pad(smask, ((0, npad - N), (0, mpad - M)))
        tmask = jnp.pad(tmask, ((0, npad - N), (0, mpad - M)))
    kern = functools.partial(_mask_focal_dice_kernel, alpha=alpha, gamma=gamma,
                             n_rows=N, n_cols=M)
    bytes_in = int(smask.size * smask.dtype.itemsize + tmask.size * tmask.dtype.itemsize)
    cost = pl.CostEstimate(flops=int(30 * npad * mpad),
                           transcendentals=int(2 * npad * mpad),
                           bytes_accessed=bytes_in)
    foc_rows, dice_rows = pl.pallas_call(
        kern,
        grid=(npad // tr, mpad // tc),            # reduction (column) axis last
        out_shape=(jax.ShapeDtypeStruct((npad, 1), jnp.float32),
                   jax.ShapeDtypeStruct((npad, 1), jnp.float32)),
        in_specs=[pl.BlockSpec((tr, tc), lambda i, k: (i, k)),
                  pl.BlockSpec((tr, tc), lambda i, k: (i, k))],
        out_specs=(pl.BlockSpec((tr, 1), lambda i, k: (i, 0)),
                   pl.BlockSpec((tr, 1), lambda i, k: (i, 0))),
        scratch_shapes=[pltpu.VMEM((tr, 1), jnp.float32),
                        pltpu.VMEM((tr, 1), jnp.float32),
                        pltpu.VMEM((tr, 1), jnp.float32)],
        compiler_params=pltpu.CompilerParams(
            dimension_semantics=("parallel", "arbitrary")),
        cost_estimate=cost,
    )(smask, tmask)
    return jnp.sum(foc_rows), jnp.sum(dice_rows)


def box_losses_jax(src, tgt, eps=1e-7):
    """L1 sum and sum of (1 - GIoU) for matched cxcywh box pairs.

    Tiny tensors ([K,4]); per the perf review a dedicated pallas_call costs more in
    launch/DMA setup than the compute, so this stays in plain JAX (XLA fuses it).
    """
    l1 = jnp.sum(jnp.abs(src - tgt))

    def to_xyxy(b):
        cx, cy, w, h = b[..., 0], b[..., 1], b[..., 2], b[..., 3]
        return cx - 0.5 * w, cy - 0.5 * h, cx + 0.5 * w, cy + 0.5 * h

    sx1, sy1, sx2, sy2 = to_xyxy(src)
    tx1, ty1, tx2, ty2 = to_xyxy(tgt)
    area_s = (sx2 - sx1) * (sy2 - sy1)
    area_t = (tx2 - tx1) * (ty2 - ty1)
    iw = jnp.maximum(jnp.minimum(sx2, tx2) - jnp.maximum(sx1, tx1), 0.0)
    ih = jnp.maximum(jnp.minimum(sy2, ty2) - jnp.maximum(sy1, ty1), 0.0)
    inter = iw * ih
    union = area_s + area_t - inter
    iou = inter / (union + eps)
    ew = jnp.maximum(jnp.maximum(sx2, tx2) - jnp.minimum(sx1, tx1), 0.0)
    eh = jnp.maximum(jnp.maximum(sy2, ty2) - jnp.minimum(sy1, ty1), 0.0)
    enc = ew * eh
    giou = iou - (enc - union) / (enc + eps)
    return l1, jnp.sum(1.0 - giou)


# ----------------------------------------------------------------------------- forward
def set_criterion_forward(outputs, targets, indices_list, valid_ratios=None, *,
                          num_classes, focal_alpha=0.25, mask_out_stride=4):
    """Mirrors SetCriterion.forward for losses = ['labels','cardinality','boxes','masks']."""
    del valid_ratios  # stored but unused by the reference losses
    losses = {}
    indices = indices_list[-1]

    num_boxes = float(sum(int(t["labels"].shape[0]) for t in targets))
    num_boxes = max(num_boxes, 1.0)
    # TODO(synk): distributed all_reduce of num_boxes / world-size division omitted.

    batch_idx = jnp.concatenate(
        [jnp.full(src.shape, b, jnp.int32) for b, (src, _) in enumerate(indices)])
    src_idx = jnp.concatenate([src for src, _ in indices])
    tgt_batch_idx = jnp.concatenate(
        [jnp.full(tgt.shape, b, jnp.int32) for b, (_, tgt) in enumerate(indices)])
    tgt_perm_idx = jnp.concatenate([tgt for _, tgt in indices])

    # ---------------- loss_labels + loss_cardinality (fused, one pass over logits) ------
    logits = outputs["pred_logits"]                      # [B, Q, C]
    B, Q, C = logits.shape
    tgt_cls_o = jnp.concatenate([t["labels"][J] for t, (_, J) in zip(targets, indices)])
    target_classes = jnp.full((B, Q), num_classes, jnp.int32)
    target_classes = target_classes.at[batch_idx, src_idx].set(tgt_cls_o)
    focal_total, card_pred = class_focal_and_cardinality(
        logits, target_classes, alpha=focal_alpha, gamma=2.0)
    # reference: sigmoid_focal_loss(...).mean(1).sum()/num_boxes * Q  ==  sum / num_boxes
    losses["loss_ce"] = focal_total / num_boxes

    # class_error: logging-only metric, tiny gather + argmax in plain JAX
    src_l = logits[batch_idx, src_idx]
    acc = jnp.mean((jnp.argmax(src_l, axis=-1) == tgt_cls_o).astype(jnp.float32)) * 100.0
    losses["class_error"] = 100.0 - acc

    tgt_lengths = jnp.array([t["labels"].shape[0] for t in targets], jnp.float32)
    losses["cardinality_error"] = jnp.mean(jnp.abs(card_pred - tgt_lengths))

    # ---------------- loss_boxes (L1 + GIoU, plain JAX) ----------------------------------
    pb = outputs["pred_boxes"]                            # [B, T, Q, 4]
    src_boxes = jnp.transpose(pb, (0, 2, 1, 3))[batch_idx, src_idx]   # [N, T, 4]
    N, nf = src_boxes.shape[:2]
    tgt_boxes = jnp.concatenate(
        [t["boxes"][i] for t, (_, i) in zip(targets, indices)], axis=0)  # [N, T, 4]
    l1_tot, giou_tot = box_losses_jax(src_boxes.reshape(N * nf, 4),
                                      tgt_boxes.reshape(N * nf, 4))
    losses["loss_bbox"] = l1_tot / nf / num_boxes
    losses["loss_giou"] = giou_tot / nf / num_boxes

    # ---------------- loss_masks (fused focal + dice, single pass over masks) ------------
    src_masks = outputs["pred_masks"]                     # [N, T, Hm, Wm]
    start = mask_out_stride // 2
    # subsample to the out-stride grid BEFORE padding/stacking (smaller intermediates)
    sub = [t["masks"][..., start::mask_out_stride, start::mask_out_stride] for t in targets]
    max_gt = max(int(s.shape[0]) for s in sub)
    tm = jnp.stack([jnp.pad(s, ((0, max_gt - s.shape[0]), (0, 0), (0, 0), (0, 0)))
                    for s in sub])                        # [B, max_gt, T, Hm, Wm]
    # binary {0,1} targets are exact in bf16 -> half the HBM traffic for the big tensor
    tmask = tm[tgt_batch_idx, tgt_perm_idx].reshape(N, -1).astype(jnp.bfloat16)
    smask = src_masks.reshape(N, -1)
    M = smask.shape[1]
    focal_m, dice_m = mask_focal_dice_sums(smask, tmask, alpha=0.25, gamma=2.0)
    losses["loss_mask"] = focal_m / M / num_boxes
    losses["loss_dice"] = dice_m / num_boxes

    # TODO(synk): aux_outputs / enc_outputs loops (they reuse the exact same kernels per
    # decoder level) and the external Hungarian matcher call are not implemented here.
    return losses


# ----------------------------------------------------------------------------- demo
if __name__ == "__main__":
    key = jax.random.PRNGKey(0)
    B, Q, C = 2, 8, 4          # batch, queries, num_classes
    T = 1                      # num_frames
    Hm = Wm = 8                # predicted-mask resolution (out-stride grid)
    stride = 4
    Hf, Wf = Hm * stride, Wm * stride
    num_gt = [3, 2]
    N = sum(num_gt)

    keys = jax.random.split(key, 8)
    pred_logits = jax.random.normal(keys[0], (B, Q, C), jnp.float32)
    pred_boxes = jax.nn.sigmoid(jax.random.normal(keys[1], (B, T, Q, 4), jnp.float32))
    pred_masks = jax.random.normal(keys[2], (N, T, Hm, Wm), jnp.float32)

    targets = []
    lk = jax.random.split(keys[3], B)
    bk = jax.random.split(keys[4], B)
    mk = jax.random.split(keys[5], B)
    for b in range(B):
        ng = num_gt[b]
        labels = jax.random.randint(lk[b], (ng,), 0, C)
        cxcy = jax.random.uniform(bk[b], (ng, T, 2), jnp.float32, 0.3, 0.7)
        wh = jax.random.uniform(jax.random.fold_in(bk[b], 1), (ng, T, 2),
                                jnp.float32, 0.1, 0.4)
        boxes = jnp.concatenate([cxcy, wh], axis=-1)
        masks = (jax.random.uniform(mk[b], (ng, T, Hf, Wf)) > 0.5).astype(jnp.float32)
        targets.append({"labels": labels, "boxes": boxes, "masks": masks})

    # Hungarian-match indices (would normally come from the matcher)
    indices = [
        (jnp.array([1, 4, 6], jnp.int32), jnp.array([0, 2, 1], jnp.int32)),
        (jnp.array([0, 5], jnp.int32), jnp.array([1, 0], jnp.int32)),
    ]

    outputs = {"pred_logits": pred_logits,
               "pred_boxes": pred_boxes,
               "pred_masks": pred_masks}

    losses = set_criterion_forward(outputs, targets, [indices], None,
                                   num_classes=C, focal_alpha=0.25,
                                   mask_out_stride=stride)
    losses = jax.tree_util.tree_map(jax.block_until_ready, losses)
    print("KERNEL_OK")
</pallas_src>

<mosaic_0001>
module attributes {stable_mosaic.version = 11 : i64} {
  func.func @_class_focal_card_kernel(%arg0: i32, %arg1: memref<16x4xf32, #tpu.memory_space<vmem>>, %arg2: memref<16x1xi32, #tpu.memory_space<vmem>>, %arg3: memref<16x1xf32, #tpu.memory_space<vmem>>, %arg4: memref<16x1xf32, #tpu.memory_space<vmem>>) attributes {dimension_semantics = [#tpu.dimension_semantics<parallel>], iteration_bounds = array<i64: 1>, scalar_prefetch = 0 : i64, scratch_operands = 0 : i64, tpu.core_type = #tpu.core_type<tc>, window_params = [{transform_indices = @transform_0, window_bounds = array<i64: 16, 4>}, {transform_indices = @transform_1, window_bounds = array<i64: 16, 1>}, {transform_indices = @transform_2, window_bounds = array<i64: 16, 1>}, {transform_indices = @transform_3, window_bounds = array<i64: 16, 1>}]} {
    %c0 = arith.constant 0 : index
    %c0_0 = arith.constant 0 : index
    %0 = vector.load %arg1[%c0, %c0_0] : memref<16x4xf32, #tpu.memory_space<vmem>>, vector<16x4xf32>
    %c0_1 = arith.constant 0 : index
    %c0_2 = arith.constant 0 : index
    %1 = vector.load %arg2[%c0_1, %c0_2] : memref<16x1xi32, #tpu.memory_space<vmem>>, vector<16x1xi32>
    %2 = tpu.iota {dimensions = array<i32: 1>} : vector<16x4xi32>
    %c16_i32 = arith.constant 16 : i32
    %3 = arith.muli %arg0, %c16_i32 : i32
    %4 = tpu.iota {dimensions = array<i32: 0>} : vector<16x1xi32>
    %5 = vector.broadcast %3 : i32 to vector<16x1xi32>
    %6 = arith.addi %5, %4 : vector<16x1xi32>
    %c16_i32_3 = arith.constant 16 : i32
    %7 = vector.broadcast %c16_i32_3 : i32 to vector<16x1xi32>
    %8 = arith.cmpi slt, %6, %7 : vector<16x1xi32>
    %9 = arith.extui %8 : vector<16x1xi1> to vector<16x1xi32>
    %10 = arith.sitofp %9 : vector<16x1xi32> to vector<16x1xf32>
    %11 = vector.broadcast %1 : vector<16x1xi32> to vector<16x4xi32>
    %12 = arith.cmpi eq, %2, %11 : vector<16x4xi32>
    %13 = arith.extui %12 : vector<16x4xi1> to vector<16x4xi32>
    %14 = arith.sitofp %13 : vector<16x4xi32> to vector<16x4xf32>
    %15 = math.absf %0 : vector<16x4xf32>
    %cst = arith.constant 0.000000e+00 : f32
    %16 = vector.broadcast %cst : f32 to vector<16x4xf32>
    %17 = arith.subf %16, %15 : vector<16x4xf32>
    %18 = math.exp %17 : vector<16x4xf32>
    %cst_4 = arith.constant 1.000000e+00 : f32
    %19 = vector.broadcast %cst_4 : f32 to vector<16x4xf32>
    %20 = arith.addf %19, %18 : vector<16x4xf32>
    %21 = tpu.reciprocal %20 {approx = true} : vector<16x4xf32> -> vector<16x4xf32>
    %cst_5 = arith.constant 0.000000e+00 : f32
    %22 = vector.broadcast %cst_5 : f32 to vector<16x4xf32>
    %23 = arith.cmpf oge, %0, %22 : vector<16x4xf32>
    %24 = arith.mulf %18, %21 : vector<16x4xf32>
    %25 = arith.select %23, %21, %24 : vector<16x4xi1>, vector<16x4xf32>
    %cst_6 = arith.constant 0.000000e+00 : f32
    %26 = vector.broadcast %cst_6 : f32 to vector<16x4xf32>
    %27 = arith.maximumf %0, %26 : vector<16x4xf32>
    %28 = arith.mulf %0, %14 : vector<16x4xf32>
    %29 = arith.subf %27, %28 : vector<16x4xf32>
    %cst_7 = arith.constant 1.000000e+00 : f32
    %30 = vector.broadcast %cst_7 : f32 to vector<16x4xf32>
    %31 = arith.addf %30, %18 : vector<16x4xf32>
    %32 = math.log %31 : vector<16x4xf32>
    %33 = arith.addf %29, %32 : vector<16x4xf32>
    %34 = arith.mulf %25, %14 : vector<16x4xf32>
    %cst_8 = arith.constant 1.000000e+00 : f32
    %35 = vector.broadcast %cst_8 : f32 to vector<16x4xf32>
    %36 = arith.subf %35, %25 : vector<16x4xf32>
    %cst_9 = arith.constant 1.000000e+00 : f32
    %37 = vector.broadcast %cst_9 : f32 to vector<16x4xf32>
    %38 = arith.subf %37, %14 : vector<16x4xf32>
    %39 = arith.mulf %36, %38 : vector<16x4xf32>
    %40 = arith.addf %34, %39 : vector<16x4xf32>
    %cst_10 = arith.constant 1.000000e+00 : f32
    %41 = vector.broadcast %cst_10 : f32 to vector<16x4xf32>
    %42 = arith.subf %41, %40 : vector<16x4xf32>
    %43 = arith.mulf %42, %42 : vector<16x4xf32>
    %44 = arith.mulf %33, %43 : vector<16x4xf32>
    %cst_11 = arith.constant 2.500000e-01 : f32
    %45 = vector.broadcast %cst_11 : f32 to vector<16x4xf32>
    %46 = arith.mulf %45, %14 : vector<16x4xf32>
    %cst_12 = arith.constant 1.000000e+00 : f32
    %47 = vector.broadcast %cst_12 : f32 to vector<16x4xf32>
    %48 = arith.subf %47, %14 : vector<16x4xf32>
    %cst_13 = arith.constant 7.500000e-01 : f32
    %49 = vector.broadcast %cst_13 : f32 to vector<16x4xf32>
    %50 = arith.mulf %49, %48 : vector<16x4xf32>
    %51 = arith.addf %46, %50 : vector<16x4xf32>
    %52 = arith.mulf %51, %44 : vector<16x4xf32>
    %cst_14 = arith.constant dense<0.000000e+00> : vector<16xf32>
    %53 = vector.multi_reduction <add>, %52, %cst_14 [1] : vector<16x4xf32> to vector<16xf32>
    %54 = vector.shape_cast %53 : vector<16xf32> to vector<16x1xf32>
    %55 = arith.mulf %54, %10 : vector<16x1xf32>
    %c0_15 = arith.constant 0 : index
    %c0_16 = arith.constant 0 : index
    %56 = vector.load %arg3[%c0_15, %c0_16] : memref<16x1xf32, #tpu.memory_space<vmem>>, vector<16x1xf32>
    tpu.vector_store %arg3[%c0_15, %c0_16], %55 {strides = array<i32>} : memref<16x1xf32, #tpu.memory_space<vmem>>, vector<16x1xf32>,
    %c3_i32 = arith.constant 3 : i32
    %57 = vector.broadcast %c3_i32 : i32 to vector<16x4xi32>
    %58 = arith.cmpi slt, %2, %57 : vector<16x4xi32>
    %cst_17 = arith.constant -1.000000e+30 : f32
    %59 = vector.broadcast %cst_17 : f32 to vector<16x4xf32>
    %60 = arith.select %58, %0, %59 : vector<16x4xi1>, vector<16x4xf32>
    %cst_18 = arith.constant dense<0xFF800000> : vector<16xf32>
    %61 = vector.multi_reduction <maximumf>, %60, %cst_18 [1] : vector<16x4xf32> to vector<16xf32>
    %62 = vector.shape_cast %61 : vector<16xf32> to vector<16x1xf32>
    %c3_i32_19 = arith.constant 3 : i32
    %63 = vector.broadcast %c3_i32_19 : i32 to vector<16x4xi32>
    %64 = arith.cmpi eq, %2, %63 : vector<16x4xi32>
    %cst_20 = arith.constant -1.000000e+30 : f32
    %65 = vector.broadcast %cst_20 : f32 to vector<16x4xf32>
    %66 = arith.select %64, %0, %65 : vector<16x4xi1>, vector<16x4xf32>
    %cst_21 = arith.constant dense<0xFF800000> : vector<16xf32>
    %67 = vector.multi_reduction <maximumf>, %66, %cst_21 [1] : vector<16x4xf32> to vector<16xf32>
    %68 = vector.shape_cast %67 : vector<16xf32> to vector<16x1xf32>
    %69 = arith.cmpf oge, %62, %68 : vector<16x1xf32>
    %70 = arith.extui %69 : vector<16x1xi1> to vector<16x1xi32>
    %71 = arith.sitofp %70 : vector<16x1xi32> to vector<16x1xf32>
    %72 = arith.mulf %71, %10 : vector<16x1xf32>
    %c0_22 = arith.constant 0 : index
    %c0_23 = arith.constant 0 : index
    %73 = vector.load %arg4[%c0_22, %c0_23] : memref<16x1xf32, #tpu.memory_space<vmem>>, vector<16x1xf32>
    tpu.vector_store %arg4[%c0_22, %c0_23], %72 {strides = array<i32>} : memref<16x1xf32, #tpu.memory_space<vmem>>, vector<16x1xf32>,
    return
  }
  func.func @transform_0(%arg0: i32) -> (i32, i32) {
    %c0_i32 = arith.constant 0 : i32
    %c0_i32_0 = arith.constant 0 : i32
    return %arg0, %c0_i32 : i32, i32
  }
  func.func @transform_1(%arg0: i32) -> (i32, i32) {
    %c0_i32 = arith.constant 0 : i32
    %c0_i32_0 = arith.constant 0 : i32
    return %arg0, %c0_i32 : i32, i32
  }
  func.func @transform_2(%arg0: i32) -> (i32, i32) {
    %c0_i32 = arith.constant 0 : i32
    %c0_i32_0 = arith.constant 0 : i32
    return %arg0, %c0_i32 : i32, i32
  }
  func.func @transform_3(%arg0: i32) -> (i32, i32) {
    %c0_i32 = arith.constant 0 : i32
    %c0_i32_0 = arith.constant 0 : i32
    return %arg0, %c0_i32 : i32, i32
  }
}

</mosaic_0001>

<llo_original>
// kernel: tpu_custom_call.1
$region0: #{tpu_custom_call.1}
  #allocation0 [shape = 'u32[]', space=smem, size = 0x4, offset = 0x4, fixed_abs, tag = 'smem constant byte address 0x4 - core index']
  #allocation1 [shape = 'u32[72,128]{1,0:T(1,128)}', space=vmem, size = 0x9000, scoped, tag = 'internal scratch']
  %s0 = inlined_call_operand.vmem [shape: f32[16,4], index: 0, kind: input, shape index: {}]
  %s1 = inlined_call_operand.vmem [shape: s32[16,1], index: 1, kind: input, shape index: {}]
  %s2 = inlined_call_operand.vmem [shape: f32[16,1], index: 2, kind: output, shape index: {0}]
  %s3 = inlined_call_operand.vmem [shape: f32[16,1], index: 3, kind: output, shape index: {1}]
  %4 = xla_tuple %s2, %s3
  %s5 = sld [smem:[#allocation0]]
  $region26: #{tpu_custom_call.1} parent=0
    _
  %s7 = ssub.s32 1, %s5
  %s8 = scalar_select 0, %s7, %s5
  // Predicated region
  $region2: #{tpu_custom_call.1} parent=0 // pred_check
    _
  $region3: #{tpu_custom_call.1} parent=0 // pred_check_branch
    %10 = sbr.rel (0) target = $region5
  $region4: #{tpu_custom_call.1} parent=0 // pred_region
    _
  $region5: #{tpu_custom_call.1} parent=0 // pred_fallthru
    _
  // Predicated region
  $region6: #{tpu_custom_call.1} parent=0 // pred_check
    _
  $region7: #{tpu_custom_call.1} parent=0 // pred_check_branch
    %12 = sbr.rel (0) target = $region9
  $region8: #{tpu_custom_call.1} parent=0 // pred_region
    _
  $region9: #{tpu_custom_call.1} parent=0 // pred_fallthru
    _
  %v13 = vld [vmem:[%s0] sm:$0xff]
  %v14 = vld [vmem:[%s0 + $0x8] sm:$0xff]
  %v15 = vld [vmem:[%s1] sm:$0xff]
  %v16 = vld [vmem:[%s1 + $0x8] sm:$0xff]
  %v17 = vlaneseq
  %v18 = vand.u32 %v17, 127
  %s19 = smul.u32 0, 16
  %v20 = vlaneseq
  %v21 = vshrl.u32 %v20, 7
  %v22 = vadd.s32 %v21, 8
  %v23 = vstv %s19
  %v24 = vadd.s32 %v23, %v21
  %v25 = vadd.s32 %v23, %v22
  %vm26 = vcmp.lt.s32.totalorder %v24, 16
  %vm27 = vcmp.lt.s32.totalorder %v25, 16
  %v28 = vsel %vm26, 1, 0
  %v29 = vsel %vm27, 1, 0
  %v30 = vcvt.s32.f32 %v28
  %v31 = vcvt.s32.f32 %v29
  %32 = vset.pattern.permute.xlu0 0
  %33 = vperm.xlu0 %32, %v15
  %v34 = vpop.permute.xlu0 %33
  %35 = vset.pattern.permute.xlu0 0
  %36 = vperm.xlu0 %35, %v16
  %v37 = vpop.permute.xlu0 %36
  %vm38 = vcmp.eq.s32.totalorder %v18, %v34
  %vm39 = vcmp.eq.s32.totalorder %v18, %v37
  %v40 = vsel %vm38, 1, 0
  %v41 = vsel %vm39, 1, 0
  %v42 = vcvt.s32.f32 %v40
  %v43 = vcvt.s32.f32 %v41
  %v44 = vand.u32 2147483647, %v13
  %v45 = vand.u32 2147483647, %v14
  %v46 = vsub.f32 0.0, %v44
  %v47 = vsub.f32 0.0, %v45
  %v48 = vmul.f32 %v46, 1.442695
  %v49 = vpow.pop %v48
  %v50 = vmul.f32 %v47, 1.442695
  %v51 = vpow.pop %v50
  %v52 = vadd.f32 %v49, 1.0
  %v53 = vadd.f32 %v51, 1.0
  %v54 = vrcp.pop %v52
  %v55 = vrcp.pop %v53
  %vm56 = vcmp.ge.f32.partialorder %v13, 0.0
  %vm57 = vcmp.ge.f32.partialorder %v14, 0.0
  %v58 = vmul.f32 %v49, %v54
  %v59 = vmul.f32 %v51, %v55
  %v60 = vsel %vm56, %v54, %v58
  %v61 = vsel %vm57, %v55, %v59
  %v62 = vmax.f32 %v13, 0.0
  %v63 = vmax.f32 %v14, 0.0
  %v64 = vmul.f32 %v13, %v42
  %v65 = vmul.f32 %v14, %v43
  %v66 = vsub.f32 %v62, %v64
  %v67 = vsub.f32 %v63, %v65
  %v68 = vlog2.pop %v52
  %v69 = vmul.f32 %v68, 0.6931472
  %v70 = vlog2.pop %v53
  %v71 = vmul.f32 %v70, 0.6931472
  %v72 = vadd.f32 %v66, %v69
  %v73 = vadd.f32 %v67, %v71
  %v74 = vmul.f32 %v60, %v42
  %v75 = vmul.f32 %v61, %v43
  %v76 = vsub.f32 1.0, %v60
  %v77 = vsub.f32 1.0, %v61
  %v78 = vsub.f32 1.0, %v42
  %v79 = vsub.f32 1.0, %v43
  %v80 = vmul.f32 %v76, %v78
  %v81 = vmul.f32 %v77, %v79
  %v82 = vadd.f32 %v74, %v80
  %v83 = vadd.f32 %v75, %v81
  %v84 = vsub.f32 1.0, %v82
  %v85 = vsub.f32 1.0, %v83
  %v86 = vmul.f32 %v84, %v84
  %v87 = vmul.f32 %v85, %v85
  %v88 = vmul.f32 %v72, %v86
  %v89 = vmul.f32 %v73, %v87
  %v90 = vmul.f32 %v42, 0.25
  %v91 = vmul.f32 %v43, 0.25
  %v92 = vmul.f32 %v78, 0.75
  %v93 = vmul.f32 %v79, 0.75
  %v94 = vadd.f32 %v90, %v92
  %v95 = vadd.f32 %v91, %v93
  %v96 = vmul.f32 %v94, %v88
  %v97 = vmul.f32 %v95, %v89
  %vm98 = vcmask 31744
  %v99 = vsel %vm98, %v96, 0.0
  %100 = vadd.xlane.f32.xlu0 %v99
  %v101 = vpop.xlane.xlu0 %100
  %v102 = vsel %vm98, %v97, 0.0
  %103 = vadd.xlane.f32.xlu0 %v102
  %v104 = vpop.xlane.xlu0 %103
  %v105 = vmul.f32 %v101, %v30
  %v106 = vmul.f32 %v104, %v31
  %vm107 = vcmask 7168
  %108 = vst.msk [vmem:[%s2] sm:$0xff] %vm107, %v105
  %109 = vst.msk [vmem:[%s2 + $0x8] sm:$0xff] %vm107, %v106
  %vm110 = vcmp.lt.s32.totalorder %v18, 3
  %v111 = vsel %vm110, %v13, -1e+30
  %v112 = vsel %vm110, %v14, -1e+30
  %v113 = vsel %vm98, %v111, -inf
  %114 = vmax.xlane.f32.xlu0 %v113
  %v115 = vpop.xlane.xlu0 %114
  %v116 = vsel %vm98, %v112, -inf
  %117 = vmax.xlane.f32.xlu0 %v116
  %v118 = vpop.xlane.xlu0 %117
  %vm119 = vcmp.eq.s32.totalorder %v18, 3
  %v120 = vsel %vm119, %v13, -1e+30
  %v121 = vsel %vm119, %v14, -1e+30
  %v122 = vsel %vm98, %v120, -inf
  %123 = vmax.xlane.f32.xlu0 %v122
  %v124 = vpop.xlane.xlu0 %123
  %v125 = vsel %vm98, %v121, -inf
  %126 = vmax.xlane.f32.xlu0 %v125
  %v127 = vpop.xlane.xlu0 %126
  %vm128 = vcmp.ge.f32.partialorder %v115, %v124
  %vm129 = vcmp.ge.f32.partialorder %v118, %v127
  %v130 = vsel %vm128, 1, 0
  %v131 = vsel %vm129, 1, 0
  %v132 = vcvt.s32.f32 %v130
  %v133 = vcvt.s32.f32 %v131
  %v134 = vmul.f32 %v132, %v30
  %v135 = vmul.f32 %v133, %v31
  %136 = vst.msk [vmem:[%s3] sm:$0xff] %vm107, %v134
  %137 = vst.msk [vmem:[%s3 + $0x8] sm:$0xff] %vm107, %v135
  // Predicated region
  $region10: #{tpu_custom_call.1} parent=0 // pred_check
    _
  $region11: #{tpu_custom_call.1} parent=0 // pred_check_branch
    %139 = sbr.rel (0) target = $region13
  $region12: #{tpu_custom_call.1} parent=0 // pred_region
    _
  $region13: #{tpu_custom_call.1} parent=0 // pred_fallthru
    _
  // Predicated region
  $region14: #{tpu_custom_call.1} parent=0 // pred_check
    _
  $region15: #{tpu_custom_call.1} parent=0 // pred_check_branch
    %141 = sbr.rel (0) target = $region17
  $region16: #{tpu_custom_call.1} parent=0 // pred_region
    _
  $region17: #{tpu_custom_call.1} parent=0 // pred_fallthru
    _
  // Predicated region
  $region18: #{tpu_custom_call.1} parent=0 // pred_check
    _
  $region19: #{tpu_custom_call.1} parent=0 // pred_check_branch
    %143 = sbr.rel (0) target = $region21
  $region20: #{tpu_custom_call.1} parent=0 // pred_region
    _
  $region21: #{tpu_custom_call.1} parent=0 // pred_fallthru
    _
  // Predicated region
  $region22: #{tpu_custom_call.1} parent=0 // pred_check
    _
  $region23: #{tpu_custom_call.1} parent=0 // pred_check_branch
    %145 = sbr.rel (0) target = $region25
  $region24: #{tpu_custom_call.1} parent=0 // pred_region
    _
  $region25: #{tpu_custom_call.1} parent=0 // pred_fallthru
    _

</llo_original>
